<compile_context>
chip_gen: v7x
topology: tpu7x:2x2x1
jax: 0.10.0
libtpu: 0.0.40
codegen_flags: <defaults>
</compile_context>

<pallas_src>
import functools
import math

import jax
import jax.numpy as jnp
from jax.experimental import pallas as pl
from jax.experimental.pallas import tpu as pltpu


def _loss_partial_kernel(pred_ref, targ_ref, out_ref, *, norm, total_rows,
                         tile_rows, need_mask):
    """One grid step: elementwise loss on a (tile_rows, L) block, reduced over
    rows to a (1, L) vector partial (cross-lane reduce deferred to wrapper)."""
    diff = pred_ref[...].astype(jnp.float32) - targ_ref[...].astype(jnp.float32)
    if norm == 1:
        val = jnp.abs(diff)
    else:  # norm == 2
        val = diff * diff

    if need_mask:
        # Last block may extend past the array; out-of-bounds rows hold
        # undefined data, so mask the *loss* (select, so no NaN propagation).
        i = pl.program_id(0)
        valid_rows = total_rows - i * tile_rows
        row_ids = jax.lax.broadcasted_iota(jnp.int32, val.shape, 0)
        val = jnp.where(row_ids < valid_rows, val, 0.0)

    # Row-reduce only; write a lane-dense (1, 1, L) partial for this block.
    out_ref[...] = jnp.sum(val, axis=0, keepdims=True).reshape(1, 1, -1)


def regression_loss(prediction, target, *, norm: int, channel_dim: int = -1,
                    block_bytes: int = 2 * 1024 * 1024):
    """Pallas implementation of RegressionLoss.forward."""
    if norm not in (1, 2):
        raise ValueError(f"Expected norm 1 or 2, but got norm={norm}")
    assert prediction.shape == target.shape

    shape = prediction.shape
    N = math.prod(shape)
    C = shape[channel_dim]  # only the divisor depends on channel_dim

    # Flatten in whatever layout the inputs already have (free reshape;
    # no transpose needed -- the total sum is layout independent).
    pred = prediction.reshape(-1)
    targ = target.reshape(-1)

    # Lane-dense width: largest multiple of 128 that divides numel, so the
    # 2-D view is a free reshape (no pad, no copy).
    L = None
    for cand in (1024, 512, 256, 128):
        if N % cand == 0:
            L = cand
            break
    if L is None:
        # Rare fallback: numel not a multiple of 128.  Pad both flat views
        # (< 128 elements); pads contribute 0 since pred == target == 0 there.
        L = 128
        n_pad = (-N) % L
        pred = jnp.pad(pred, (0, n_pad))
        targ = jnp.pad(targ, (0, n_pad))

    R = pred.shape[0] // L
    pred2 = pred.reshape(R, L)
    targ2 = targ.reshape(R, L)

    # ~block_bytes (default 2 MiB) per input block: 2 inputs x 2 pipeline
    # buffers stays well inside the default scoped VMEM on v5e/v6e/v7x while
    # amortizing the ~0.35 us per-grid-step overhead.
    itemsize = jnp.dtype(pred2.dtype).itemsize
    target_block_elems = max(1, block_bytes // itemsize)
    tile_rows = max(1, target_block_elems // L)
    if tile_rows < R:
        tile_rows = max(8, (tile_rows // 8) * 8)  # sublane-aligned
    tile_rows = min(tile_rows, R)                  # == R -> full-dim block

    grid_r = pl.cdiv(R, tile_rows)
    need_mask = (R % tile_rows) != 0

    kernel = functools.partial(
        _loss_partial_kernel, norm=norm, total_rows=R, tile_rows=tile_rows,
        need_mask=need_mask)

    in_bytes = int(N) * (jnp.dtype(prediction.dtype).itemsize
                         + jnp.dtype(target.dtype).itemsize)
    cost = pl.CostEstimate(flops=3 * int(N), transcendentals=0,
                           bytes_accessed=in_bytes + int(grid_r) * L * 4)

    partials = pl.pallas_call(
        kernel,
        out_shape=jax.ShapeDtypeStruct((grid_r, 1, L), jnp.float32),
        grid_spec=pltpu.PrefetchScalarGridSpec(
            num_scalar_prefetch=0,
            grid=(grid_r,),
            in_specs=[
                pl.BlockSpec((tile_rows, L), lambda i: (i, 0)),
                pl.BlockSpec((tile_rows, L), lambda i: (i, 0)),
            ],
            # Each grid step owns its own output block -> no resident
            # accumulator, so the grid axis can be 'parallel' (both TCs on v7x).
            out_specs=pl.BlockSpec((1, 1, L), lambda i: (i, 0, 0)),
        ),
        compiler_params=pltpu.CompilerParams(
            dimension_semantics=("parallel",)),
        cost_estimate=cost,
    )(pred2, targ2)

    total = jnp.sum(partials)  # single final reduce, in the wrapper
    # mean over the channel-summed tensor == total / (numel / C)
    return (total * jnp.float32(C) / jnp.float32(N)).astype(jnp.float32)


def _reference(prediction, target, norm, channel_dim=-1):
    diff = prediction.astype(jnp.float32) - target.astype(jnp.float32)
    loss = jnp.abs(diff) if norm == 1 else diff * diff
    loss = jnp.sum(loss, axis=channel_dim, keepdims=True)
    return jnp.mean(loss)


if __name__ == "__main__":
    key = jax.random.PRNGKey(0)
    k1, k2 = jax.random.split(key)

    # Small NHWC shapes consistent with the module (channel_dim=-1 default).
    B, H, W, C = 2, 16, 16, 4
    prediction = jax.random.normal(k1, (B, H, W, C), dtype=jnp.float32)
    target = jax.random.normal(k2, (B, H, W, C), dtype=jnp.float32)

    for norm in (1, 2):
        out = jax.block_until_ready(regression_loss(prediction, target, norm=norm))
        ref = _reference(prediction, target, norm)
        assert jnp.allclose(out, ref, rtol=1e-5, atol=1e-5), (norm, out, ref)

    # channel_dim != -1 (NCHW-style): no transpose is done, only the divisor changes.
    pred_nchw = jnp.transpose(prediction, (0, 3, 1, 2))
    targ_nchw = jnp.transpose(target, (0, 3, 1, 2))
    for norm in (1, 2):
        out = jax.block_until_ready(
            regression_loss(pred_nchw, targ_nchw, norm=norm, channel_dim=1))
        ref = _reference(pred_nchw, targ_nchw, norm, channel_dim=1)
        assert jnp.allclose(out, ref, rtol=1e-5, atol=1e-5), (norm, out, ref)

    # Multi-tile path with a masked (non-divisible) tail block.
    k3, k4 = jax.random.split(k2)
    p2 = jax.random.normal(k3, (2, 9, 16, 16), dtype=jnp.float32)
    t2 = jax.random.normal(k4, (2, 9, 16, 16), dtype=jnp.float32)
    for norm in (1, 2):
        out = jax.block_until_ready(
            regression_loss(p2, t2, norm=norm, block_bytes=16 * 1024))
        ref = _reference(p2, t2, norm)
        assert jnp.allclose(out, ref, rtol=1e-5, atol=1e-5), (norm, out, ref)

    # Fallback path: numel not a multiple of 128.
    k5, k6 = jax.random.split(k4)
    p3 = jax.random.normal(k5, (2, 3, 5, 7), dtype=jnp.float32)
    t3 = jax.random.normal(k6, (2, 3, 5, 7), dtype=jnp.float32)
    for norm in (1, 2):
        out = jax.block_until_ready(regression_loss(p3, t3, norm=norm))
        ref = _reference(p3, t3, norm)
        assert jnp.allclose(out, ref, rtol=1e-5, atol=1e-5), (norm, out, ref)

    print("KERNEL_OK")
</pallas_src>

<mosaic_0001>
module attributes {stable_mosaic.version = 11 : i64} {
  func.func @_loss_partial_kernel(%arg0: i32, %arg1: memref<2x1024xf32, #tpu.memory_space<vmem>>, %arg2: memref<2x1024xf32, #tpu.memory_space<vmem>>, %arg3: memref<1x1x1024xf32, #tpu.memory_space<vmem>>) attributes {dimension_semantics = [#tpu.dimension_semantics<parallel>], iteration_bounds = array<i64: 1>, scalar_prefetch = 0 : i64, scratch_operands = 0 : i64, tpu.core_type = #tpu.core_type<tc>, window_params = [{transform_indices = @transform_0, window_bounds = array<i64: 2, 1024>}, {transform_indices = @transform_1, window_bounds = array<i64: 2, 1024>}, {transform_indices = @transform_2, window_bounds = array<i64: 1, 1, 1024>}]} {
    %c0 = arith.constant 0 : index
    %c0_0 = arith.constant 0 : index
    %0 = vector.load %arg1[%c0, %c0_0] : memref<2x1024xf32, #tpu.memory_space<vmem>>, vector<2x1024xf32>
    %c0_1 = arith.constant 0 : index
    %c0_2 = arith.constant 0 : index
    %1 = vector.load %arg2[%c0_1, %c0_2] : memref<2x1024xf32, #tpu.memory_space<vmem>>, vector<2x1024xf32>
    %2 = arith.subf %0, %1 : vector<2x1024xf32>
    %3 = math.absf %2 : vector<2x1024xf32>
    %cst = arith.constant dense<0.000000e+00> : vector<1024xf32>
    %4 = vector.multi_reduction <add>, %3, %cst [0] : vector<2x1024xf32> to vector<1024xf32>
    %5 = vector.shape_cast %4 : vector<1024xf32> to vector<1x1024xf32>
    %6 = vector.shape_cast %5 : vector<1x1024xf32> to vector<1x1x1024xf32>
    %c0_3 = arith.constant 0 : index
    %c0_4 = arith.constant 0 : index
    %c0_5 = arith.constant 0 : index
    %7 = vector.load %arg3[%c0_3, %c0_4, %c0_5] : memref<1x1x1024xf32, #tpu.memory_space<vmem>>, vector<1x1x1024xf32>
    tpu.vector_store %arg3[%c0_3, %c0_4, %c0_5], %6 {strides = array<i32>} : memref<1x1x1024xf32, #tpu.memory_space<vmem>>, vector<1x1x1024xf32>,
    return
  }
  func.func @transform_0(%arg0: i32) -> (i32, i32) {
    %c0_i32 = arith.constant 0 : i32
    %c0_i32_0 = arith.constant 0 : i32
    return %arg0, %c0_i32 : i32, i32
  }
  func.func @transform_1(%arg0: i32) -> (i32, i32) {
    %c0_i32 = arith.constant 0 : i32
    %c0_i32_0 = arith.constant 0 : i32
    return %arg0, %c0_i32 : i32, i32
  }
  func.func @transform_2(%arg0: i32) -> (i32, i32, i32) {
    %c0_i32 = arith.constant 0 : i32
    %c0_i32_0 = arith.constant 0 : i32
    %c0_i32_1 = arith.constant 0 : i32
    return %arg0, %c0_i32, %c0_i32_0 : i32, i32, i32
  }
}

</mosaic_0001>

<llo_original>
// kernel: tpu_custom_call.1
$region0: #{tpu_custom_call.1}
  #allocation0 [shape = 'u32[]', space=smem, size = 0x4, offset = 0x4, fixed_abs, tag = 'smem constant byte address 0x4 - core index']
  #allocation1 [shape = 'u32[144,128]{1,0:T(1,128)}', space=vmem, size = 0x12000, scoped, tag = 'internal scratch']
  %s0 = inlined_call_operand.hbm [shape: f32[2,1024], index: 0, kind: input, shape index: {}]
  %s1 = inlined_call_operand.hbm [shape: f32[2,1024], index: 1, kind: input, shape index: {}]
  %s2 = inlined_call_operand.hbm [shape: f32[1,1,1024], index: 2, kind: output, shape index: {}]
  %s3 = sld [smem:[#allocation0]]
  $region26: #{tpu_custom_call.1} parent=0
    _
  %s5 = ssub.s32 1, %s3
  %s6 = scalar_select 0, %s5, %s3
  $region1: #{tpu_custom_call.1} parent=0
    #allocation2 [shape = 'u8[8192]{0}', space=vmem, size = 0x2000, scoped, tag = 'input window, operand 0, single buffered']
    #allocation3 [shape = 's32[1]{0}', space=sflag, size = 0x4, scoped, tag = 'scoped memory for tpu_custom_call.1']
    #allocation4 [shape = 's32[1]{0}', space=sflag, size = 0x4, scoped, tag = 'scoped memory for tpu_custom_call.1']
    #allocation5 [shape = 'u8[8192]{0}', space=vmem, size = 0x2000, scoped, tag = 'input window, operand 1, single buffered']
    #allocation6 [shape = 's32[1]{0}', space=sflag, size = 0x4, scoped, tag = 'scoped memory for tpu_custom_call.1']
    #allocation7 [shape = 'u8[4096]{0}', space=vmem, size = 0x1000, scoped, tag = 'output window, operand 0, single buffered']
    %7 = vsyncpa [#allocation3], 0
    %8 = vsyncpa [#allocation6], 0
    %9 = vsyncpa [#allocation4], 0
    // Predicated region
    $region2: #{tpu_custom_call.1} parent=1 // pred_check
      _
    $region3: #{tpu_custom_call.1} parent=1 // pred_check_branch
      %11 = sbr.rel (0) target = $region5
    $region4: #{tpu_custom_call.1} parent=1 // pred_region
      %s13 = ssub.s32 256, 256
      %14 = vsyncadd [#allocation3], %s13
      %s16 = sshll.u32 [#allocation2], 4
      %s17 = int_to_ptr.vmem [resolvable:$true] %s16
      %19 = dma.hbm_to_vmem [thread:$0]  %s0, 256, %s17, [#allocation3]
    $region5: #{tpu_custom_call.1} parent=1 // pred_fallthru
      _
    // Predicated region
    $region6: #{tpu_custom_call.1} parent=1 // pred_check
      _
    $region7: #{tpu_custom_call.1} parent=1 // pred_check_branch
      %21 = sbr.rel (0) target = $region9
    $region8: #{tpu_custom_call.1} parent=1 // pred_region
      %s23 = ssub.s32 256, 256
      %24 = vsyncadd [#allocation6], %s23
      %s26 = sshll.u32 [#allocation5], 4
      %s27 = int_to_ptr.vmem [resolvable:$true] %s26
      %29 = dma.hbm_to_vmem [thread:$0]  %s1, 256, %s27, [#allocation6]
    $region9: #{tpu_custom_call.1} parent=1 // pred_fallthru
      _
    // Predicated region
    $region10: #{tpu_custom_call.1} parent=1 // pred_check
      _
    $region11: #{tpu_custom_call.1} parent=1 // pred_check_branch
      %31 = sbr.rel (0) target = $region13
    $region12: #{tpu_custom_call.1} parent=1 // pred_region
      %32 = dma.done [#allocation3], 256
    $region13: #{tpu_custom_call.1} parent=1 // pred_fallthru
      _
    // Predicated region
    $region14: #{tpu_custom_call.1} parent=1 // pred_check
      _
    $region15: #{tpu_custom_call.1} parent=1 // pred_check_branch
      %34 = sbr.rel (0) target = $region17
    $region16: #{tpu_custom_call.1} parent=1 // pred_region
      %35 = dma.done [#allocation6], 256
    $region17: #{tpu_custom_call.1} parent=1 // pred_fallthru
      _
    %v36 = vld [vmem:[#allocation2] sm:$0xff]
    %v37 = vld [vmem:[#allocation2 + $0x8] sm:$0xff]
    %v38 = vld [vmem:[#allocation5] sm:$0xff]
    %v39 = vld [vmem:[#allocation5 + $0x8] sm:$0xff]
    %v40 = vsub.f32 %v36, %v38
    %v41 = vsub.f32 %v37, %v39
    %v42 = vand.u32 2147483647, %v40
    %v43 = vand.u32 2147483647, %v41
    %v46 = vcombine.high %v42, %v42
    %v48 = vunpack.c.l.s4 1983009808
    %v49 = vunpack.c.0.s8 %v48
    %v50 = vlaneseq
    %v51 = vshrl.u32 %v50, 7
    %v52 = vsub.s32 %v49, %v51
    %v53 = vrot.slane %v42, %v52
    %v55 = vunpack.c.l.s4 1983009808
    %v56 = vunpack.c.0.s8 %v55
    %v57 = vlaneseq
    %v58 = vshrl.u32 %v57, 7
    %v59 = vsub.s32 %v56, %v58
    %v60 = vrot.slane %v46, %v59
    %v61 = vcombine.high %v53, %v53
    %v62 = vcombine.high %v60, %v60
    %v63 = vcombine.high %v43, %v43
    %v65 = vunpack.c.l.s4 1983009808
    %v66 = vunpack.c.0.s8 %v65
    %v67 = vlaneseq
    %v68 = vshrl.u32 %v67, 7
    %v69 = vsub.s32 %v66, %v68
    %v70 = vrot.slane %v43, %v69
    %v72 = vunpack.c.l.s4 1983009808
    %v73 = vunpack.c.0.s8 %v72
    %v74 = vlaneseq
    %v75 = vshrl.u32 %v74, 7
    %v76 = vsub.s32 %v73, %v75
    %v77 = vrot.slane %v63, %v76
    %v78 = vcombine.high %v70, %v70
    %v79 = vcombine.high %v77, %v77
    %vm88 = vcmask 1041408
    %v89 = vsel %vm88, %v53, 0.0
    %v90 = vrot.slane %v89, 4
    %v91 = vadd.f32 %v89, %v90
    %v92 = vrot.slane %v91, 2
    %v93 = vadd.f32 %v91, %v92
    %v94 = vrot.slane %v93, 1
    %v95 = vadd.f32 %v93, %v94
    %v96 = vsel %vm88, %v61, 0.0
    %v97 = vrot.slane %v96, 4
    %v98 = vadd.f32 %v96, %v97
    %v99 = vrot.slane %v98, 2
    %v100 = vadd.f32 %v98, %v99
    %v101 = vrot.slane %v100, 1
    %v102 = vadd.f32 %v100, %v101
    %v103 = vsel %vm88, %v60, 0.0
    %v104 = vrot.slane %v103, 4
    %v105 = vadd.f32 %v103, %v104
    %v106 = vrot.slane %v105, 2
    %v107 = vadd.f32 %v105, %v106
    %v108 = vrot.slane %v107, 1
    %v109 = vadd.f32 %v107, %v108
    %v110 = vsel %vm88, %v62, 0.0
    %v111 = vrot.slane %v110, 4
    %v112 = vadd.f32 %v110, %v111
    %v113 = vrot.slane %v112, 2
    %v114 = vadd.f32 %v112, %v113
    %v115 = vrot.slane %v114, 1
    %v116 = vadd.f32 %v114, %v115
    %v117 = vsel %vm88, %v70, 0.0
    %v118 = vrot.slane %v117, 4
    %v119 = vadd.f32 %v117, %v118
    %v120 = vrot.slane %v119, 2
    %v121 = vadd.f32 %v119, %v120
    %v122 = vrot.slane %v121, 1
    %v123 = vadd.f32 %v121, %v122
    %v124 = vsel %vm88, %v78, 0.0
    %v125 = vrot.slane %v124, 4
    %v126 = vadd.f32 %v124, %v125
    %v127 = vrot.slane %v126, 2
    %v128 = vadd.f32 %v126, %v127
    %v129 = vrot.slane %v128, 1
    %v130 = vadd.f32 %v128, %v129
    %v131 = vsel %vm88, %v77, 0.0
    %v132 = vrot.slane %v131, 4
    %v133 = vadd.f32 %v131, %v132
    %v134 = vrot.slane %v133, 2
    %v135 = vadd.f32 %v133, %v134
    %v136 = vrot.slane %v135, 1
    %v137 = vadd.f32 %v135, %v136
    %v138 = vsel %vm88, %v79, 0.0
    %v139 = vrot.slane %v138, 4
    %v140 = vadd.f32 %v138, %v139
    %v141 = vrot.slane %v140, 2
    %v142 = vadd.f32 %v140, %v141
    %v143 = vrot.slane %v142, 1
    %v144 = vadd.f32 %v142, %v143
    %v153 = vcombine.low %v95, %v102
    %v154 = vcombine.low %v109, %v116
    %v155 = vcombine.low %v123, %v130
    %v156 = vcombine.low %v137, %v144
    %v158 = vunpack.c.l.s4 1966171168
    %v159 = vunpack.c.0.s8 %v158
    %v160 = vlaneseq
    %v161 = vshrl.u32 %v160, 7
    %v162 = vsub.s32 %v159, %v161
    %v163 = vrot.slane %v153, %v162
    %v165 = vunpack.c.l.s4 1966171168
    %v166 = vunpack.c.0.s8 %v165
    %v167 = vlaneseq
    %v168 = vshrl.u32 %v167, 7
    %v169 = vsub.s32 %v166, %v168
    %v170 = vrot.slane %v154, %v169
    %v172 = vunpack.c.l.s4 1966171168
    %v173 = vunpack.c.0.s8 %v172
    %v174 = vlaneseq
    %v175 = vshrl.u32 %v174, 7
    %v176 = vsub.s32 %v173, %v175
    %v177 = vrot.slane %v155, %v176
    %v179 = vunpack.c.l.s4 1966171168
    %v180 = vunpack.c.0.s8 %v179
    %v181 = vlaneseq
    %v182 = vshrl.u32 %v181, 7
    %v183 = vsub.s32 %v180, %v182
    %v184 = vrot.slane %v156, %v183
    %v185 = vcombine.low %v163, %v170
    %v186 = vcombine.low %v177, %v184
    %v188 = vunpack.c.l.s4 1966171168
    %v189 = vunpack.c.0.s8 %v188
    %v190 = vlaneseq
    %v191 = vshrl.u32 %v190, 7
    %v192 = vsub.s32 %v189, %v191
    %v193 = vrot.slane %v185, %v192
    %v195 = vunpack.c.l.s4 1966171168
    %v196 = vunpack.c.0.s8 %v195
    %v197 = vlaneseq
    %v198 = vshrl.u32 %v197, 7
    %v199 = vsub.s32 %v196, %v198
    %v200 = vrot.slane %v186, %v199
    %v201 = vcombine.low %v193, %v200
    %203 = vst [vmem:[#allocation7] sm:$0xff] %v201
    // Predicated region
    $region18: #{tpu_custom_call.1} parent=1 // pred_check
      _
    $region19: #{tpu_custom_call.1} parent=1 // pred_check_branch
      %205 = sbr.rel (0) target = $region21
    $region20: #{tpu_custom_call.1} parent=1 // pred_region
      %s207 = ssub.s32 128, 128
      %208 = vsyncadd [#allocation4], %s207
      %s210 = sshll.u32 [#allocation7], 4
      %s211 = int_to_ptr.vmem [resolvable:$true] %s210
      %213 = dma.vmem_to_hbm [thread:$0]  %s211, 128, %s2, [#allocation4]
    $region21: #{tpu_custom_call.1} parent=1 // pred_fallthru
      _
    // Predicated region
    $region22: #{tpu_custom_call.1} parent=1 // pred_check
      _
    $region23: #{tpu_custom_call.1} parent=1 // pred_check_branch
      %215 = sbr.rel (0) target = $region25
    $region24: #{tpu_custom_call.1} parent=1 // pred_region
      %216 = dma.done [#allocation4], 128
    $region25: #{tpu_custom_call.1} parent=1 // pred_fallthru
      _
    %217 = vsyncpa [#allocation3], 1
    %218 = vsyncpa [#allocation6], 1
    %219 = vsyncpa [#allocation4], 1

</llo_original>
